<compile_context>
chip_gen: v7x
topology: tpu7x:2x2x1
jax: 0.10.0
libtpu: 0.0.40
codegen_flags: <defaults>
</compile_context>

<pallas_src>
import jax
import jax.numpy as jnp
from jax.experimental import pallas as pl
from jax.experimental.pallas import tpu as pltpu

BN_EPS = 1e-5
HIDDEN = 128


# ----------------------------------------------------------------------------- kernel
def stage_kernel(an_ref, ar_ref, x_ref,        # bf16: (N,N) A_hat, (N,N) A_raw, (N,H) x
                 wc_ref, wf_ref,               # bf16: (H,H) conv weight (row-padded), (H,H) fc weight
                 bfold_ref, s_ref, t_ref,      # f32 : (1,H) folded bias, BN scale, BN shift
                 wrel_ref, wroot_ref,          # f32 : (1,H) SAG GraphConv weights (as rows)
                 bs_ref,                       # f32 SMEM (1,1): SAG GraphConv bias
                 h_ref, score_ref):            # f32 out: (N,H) features, (N,1) tanh(score)
    # ---- GCNConv:  A_hat @ (X Wc)   (bias folded into bfold) ----
    xc = jnp.dot(x_ref[...], wc_ref[...], preferred_element_type=jnp.float32)
    agg = jnp.dot(an_ref[...], xc.astype(jnp.bfloat16),
                  preferred_element_type=jnp.float32)
    # ---- fc + folded conv bias, ReLU, eval-BatchNorm as one FMA ----
    f = jnp.dot(agg.astype(jnp.bfloat16), wf_ref[...],
                preferred_element_type=jnp.float32) + bfold_ref[...]
    h = jnp.maximum(f, 0.0) * s_ref[...] + t_ref[...]
    h_ref[...] = h

    # ---- SAGPooling score: GraphConv(hidden, 1) -> tanh ----
    hb = h.astype(jnp.bfloat16)
    neigh = jnp.dot(ar_ref[...], hb, preferred_element_type=jnp.float32)     # sum over neighbors
    sc = jnp.sum(neigh * wrel_ref[...] + h * wroot_ref[...],
                 axis=-1, keepdims=True) + bs_ref[0, 0]
    score_ref[...] = jnp.tanh(sc)


# ----------------------------------------------------------------------------- wrappers
def run_stage_pallas(A_norm, A_raw, x, sp):
    """One GCN stage (conv + fc + relu + bn + SAG score) as a fused Pallas kernel."""
    N = x.shape[0]
    H = sp["wf"].shape[0]
    bf16 = jnp.bfloat16
    inputs = (A_norm.astype(bf16), A_raw.astype(bf16), x.astype(bf16),
              sp["wc"].astype(bf16), sp["wf"].astype(bf16),
              sp["bfold"], sp["s"], sp["t"],
              sp["wrel"], sp["wroot"], sp["bs"])

    vmem = pl.BlockSpec(memory_space=pltpu.MemorySpace.VMEM)
    smem = pl.BlockSpec(memory_space=pltpu.MemorySpace.SMEM)
    in_specs = [vmem] * 10 + [smem]

    flops = 4 * N * H * H + 4 * N * N * H          # 4 matmuls (f32 accumulation)
    bytes_accessed = (sum(int(a.size) * a.dtype.itemsize for a in inputs)
                      + N * H * 4 + N * 4)
    return pl.pallas_call(
        stage_kernel,
        out_shape=(jax.ShapeDtypeStruct((N, H), jnp.float32),
                   jax.ShapeDtypeStruct((N, 1), jnp.float32)),
        in_specs=in_specs,
        out_specs=(vmem, vmem),
        cost_estimate=pl.CostEstimate(flops=flops, transcendentals=N,
                                      bytes_accessed=bytes_accessed),
    )(*inputs)


def run_stage_ref(A_norm, A_raw, x, sp):
    """Plain-JAX mirror of stage_kernel (same bf16 casts / dot ordering) for checking."""
    bf16 = jnp.bfloat16
    xc = jnp.dot(x.astype(bf16), sp["wc"].astype(bf16), preferred_element_type=jnp.float32)
    agg = jnp.dot(A_norm.astype(bf16), xc.astype(bf16), preferred_element_type=jnp.float32)
    f = jnp.dot(agg.astype(bf16), sp["wf"].astype(bf16),
                preferred_element_type=jnp.float32) + sp["bfold"]
    h = jnp.maximum(f, 0.0) * sp["s"] + sp["t"]
    neigh = jnp.dot(A_raw.astype(bf16), h.astype(bf16), preferred_element_type=jnp.float32)
    sc = jnp.sum(neigh * sp["wrel"] + h * sp["wroot"], axis=-1, keepdims=True) + sp["bs"][0, 0]
    return h, jnp.tanh(sc)


def gcn_norm_dense(A):
    """A_hat = D^-1/2 (A + I) D^-1/2 (dense, f32)."""
    N = A.shape[0]
    A1 = A + jnp.eye(N, dtype=jnp.float32)
    deg = jnp.sum(A1, axis=1)
    dinv = jax.lax.rsqrt(jnp.maximum(deg, 1.0))
    return dinv[:, None] * A1 * dinv[None, :]


def gcn_forward(x, edge_index, stages, stage_fn):
    """Full forward. x: (N, F_in) f32, edge_index: (2, E) int32. Returns ((1, H), stage records)."""
    N, fin = x.shape
    H = stages[0]["wf"].shape[0]
    # Pad input features to the 128-lane hidden width (conv1 weight rows are zero-padded to match).
    h = jnp.zeros((N, H), jnp.float32).at[:, :fin].set(x)
    src, dst = edge_index[0], edge_index[1]
    A = jnp.zeros((N, N), jnp.float32).at[dst, src].add(1.0)   # messages flow src -> dst

    records = []
    for sp in stages:
        A_norm = gcn_norm_dense(A)
        hh, score = stage_fn(A_norm, A, h, sp)
        records.append((A_norm, A, h, hh, score))

        # ---- SAGPooling glue (plain JAX): top-k by tanh(score), gate features, filter edges ----
        n_cur = hh.shape[0]
        k = (n_cur + 1) // 2                       # ratio = 0.5, ceil
        sflat = score[:, 0]
        _, perm = jax.lax.top_k(sflat, k)
        h = hh[perm] * sflat[perm][:, None]
        A = A[perm][:, perm]                       # filter_adj: keep edges between kept nodes

    # global_mean_pool over the single graph (batch all zeros)
    out = jnp.mean(h, axis=0, keepdims=True)
    return out, records


# ----------------------------------------------------------------------------- params
def make_params(key, in_dim=7, hidden=HIDDEN):
    """4 stage param dicts with eval-mode BN and conv-bias already folded."""
    dims_in = [in_dim, hidden, hidden, hidden]
    keys = jax.random.split(key, 4 * 11)
    stages = []
    for si in range(4):
        k = keys[si * 11:(si + 1) * 11]
        fin = dims_in[si]

        def u(kk, shape, fan_in):
            b = 1.0 / jnp.sqrt(fan_in)
            return jax.random.uniform(kk, shape, jnp.float32, -b, b)

        wc_raw = u(k[0], (fin, hidden), fin)                 # GCNConv weight (fin, H)
        wc = jnp.zeros((hidden, hidden), jnp.float32).at[:fin, :].set(wc_raw)
        bc = u(k[1], (1, hidden), fin)                       # GCNConv bias
        wf = u(k[2], (hidden, hidden), hidden)               # fc weight
        bf = u(k[3], (1, hidden), hidden)                    # fc bias
        gamma = 1.0 + 0.1 * jax.random.normal(k[4], (1, hidden), jnp.float32)
        beta = 0.1 * jax.random.normal(k[5], (1, hidden), jnp.float32)
        rmean = 0.1 * jax.random.normal(k[6], (1, hidden), jnp.float32)
        rvar = jnp.abs(1.0 + 0.1 * jax.random.normal(k[7], (1, hidden), jnp.float32))
        wrel = u(k[8], (1, hidden), hidden)                  # SAG GraphConv neighbor weight
        wroot = u(k[9], (1, hidden), hidden)                 # SAG GraphConv root weight
        bs = u(k[10], (1, 1), hidden)                        # SAG GraphConv bias

        s = gamma * jax.lax.rsqrt(rvar + BN_EPS)             # fold BN (eval) to scale/shift
        t = beta - rmean * s
        bfold = bc @ wf + bf                                 # fold conv bias through fc
        stages.append(dict(wc=wc, wf=wf, bfold=bfold, s=s, t=t,
                           wrel=wrel, wroot=wroot, bs=bs))
    return stages


# ----------------------------------------------------------------------------- main
if __name__ == "__main__":
    key = jax.random.PRNGKey(0)
    kx, ke, kp = jax.random.split(key, 3)

    N, F_IN, E = 128, 7, 512                     # nodes, input features (GCNConv(7, 128)), edges
    x = jax.random.normal(kx, (N, F_IN), jnp.float32)
    edge_index = jax.random.randint(ke, (2, E), 0, N, dtype=jnp.int32)
    stages = make_params(kp, in_dim=F_IN, hidden=HIDDEN)

    out, recs = gcn_forward(x, edge_index, stages, run_stage_pallas)
    out = jax.block_until_ready(out)
    assert out.shape == (1, HIDDEN)

    # Validate every Pallas stage against a plain-JAX mirror on the exact same stage inputs
    # (avoids any sensitivity of the top-k selection glue).
    for sp, (A_norm, A_raw, x_in, h_k, s_k) in zip(stages, recs):
        h_r, s_r = run_stage_ref(A_norm, A_raw, x_in, sp)
        assert jnp.allclose(h_k, h_r, atol=1e-2, rtol=1e-2), "stage feature mismatch"
        assert jnp.allclose(s_k, s_r, atol=1e-2, rtol=1e-2), "stage score mismatch"

    print("KERNEL_OK")
</pallas_src>

<mosaic_0001>
module attributes {stable_mosaic.version = 11 : i64} {
  func.func @stage_kernel(%arg0: memref<128x128xbf16, #tpu.memory_space<vmem>>, %arg1: memref<128x128xbf16, #tpu.memory_space<vmem>>, %arg2: memref<128x128xbf16, #tpu.memory_space<vmem>>, %arg3: memref<128x128xbf16, #tpu.memory_space<vmem>>, %arg4: memref<128x128xbf16, #tpu.memory_space<vmem>>, %arg5: memref<1x128xf32, #tpu.memory_space<vmem>>, %arg6: memref<1x128xf32, #tpu.memory_space<vmem>>, %arg7: memref<1x128xf32, #tpu.memory_space<vmem>>, %arg8: memref<1x128xf32, #tpu.memory_space<vmem>>, %arg9: memref<1x128xf32, #tpu.memory_space<vmem>>, %arg10: memref<1x1xf32, #tpu.memory_space<smem>>, %arg11: memref<128x128xf32, #tpu.memory_space<vmem>>, %arg12: memref<128x1xf32, #tpu.memory_space<vmem>>) attributes {dimension_semantics = [], scalar_prefetch = 0 : i64, scratch_operands = 0 : i64, tpu.core_type = #tpu.core_type<tc>} {
    %c0 = arith.constant 0 : index
    %c0_0 = arith.constant 0 : index
    %0 = vector.load %arg2[%c0, %c0_0] : memref<128x128xbf16, #tpu.memory_space<vmem>>, vector<128x128xbf16>
    %c0_1 = arith.constant 0 : index
    %c0_2 = arith.constant 0 : index
    %1 = vector.load %arg3[%c0_1, %c0_2] : memref<128x128xbf16, #tpu.memory_space<vmem>>, vector<128x128xbf16>
    %cst = arith.constant dense<0.000000e+00> : vector<128x128xf32>
    %2 = tpu.matmul %0, %1, %cst {dimension_numbers = #tpu.dot_dimension_numbers<[1], [0], [0], [1], [0, 0, 1, 1], [], []>} : vector<128x128xbf16>, vector<128x128xbf16>, vector<128x128xf32> -> vector<128x128xf32>
    %c0_3 = arith.constant 0 : index
    %c0_4 = arith.constant 0 : index
    %3 = vector.load %arg0[%c0_3, %c0_4] : memref<128x128xbf16, #tpu.memory_space<vmem>>, vector<128x128xbf16>
    %4 = arith.truncf %2 : vector<128x128xf32> to vector<128x128xbf16>
    %cst_5 = arith.constant dense<0.000000e+00> : vector<128x128xf32>
    %5 = tpu.matmul %3, %4, %cst_5 {dimension_numbers = #tpu.dot_dimension_numbers<[1], [0], [0], [1], [0, 0, 1, 1], [], []>} : vector<128x128xbf16>, vector<128x128xbf16>, vector<128x128xf32> -> vector<128x128xf32>
    %6 = arith.truncf %5 : vector<128x128xf32> to vector<128x128xbf16>
    %c0_6 = arith.constant 0 : index
    %c0_7 = arith.constant 0 : index
    %7 = vector.load %arg4[%c0_6, %c0_7] : memref<128x128xbf16, #tpu.memory_space<vmem>>, vector<128x128xbf16>
    %cst_8 = arith.constant dense<0.000000e+00> : vector<128x128xf32>
    %8 = tpu.matmul %6, %7, %cst_8 {dimension_numbers = #tpu.dot_dimension_numbers<[1], [0], [0], [1], [0, 0, 1, 1], [], []>} : vector<128x128xbf16>, vector<128x128xbf16>, vector<128x128xf32> -> vector<128x128xf32>
    %c0_9 = arith.constant 0 : index
    %c0_10 = arith.constant 0 : index
    %9 = vector.load %arg5[%c0_9, %c0_10] : memref<1x128xf32, #tpu.memory_space<vmem>>, vector<1x128xf32>
    %10 = vector.broadcast %9 : vector<1x128xf32> to vector<128x128xf32>
    %11 = arith.addf %8, %10 : vector<128x128xf32>
    %cst_11 = arith.constant 0.000000e+00 : f32
    %12 = vector.broadcast %cst_11 : f32 to vector<128x128xf32>
    %13 = arith.maximumf %11, %12 : vector<128x128xf32>
    %c0_12 = arith.constant 0 : index
    %c0_13 = arith.constant 0 : index
    %14 = vector.load %arg6[%c0_12, %c0_13] : memref<1x128xf32, #tpu.memory_space<vmem>>, vector<1x128xf32>
    %15 = vector.broadcast %14 : vector<1x128xf32> to vector<128x128xf32>
    %16 = arith.mulf %13, %15 : vector<128x128xf32>
    %c0_14 = arith.constant 0 : index
    %c0_15 = arith.constant 0 : index
    %17 = vector.load %arg7[%c0_14, %c0_15] : memref<1x128xf32, #tpu.memory_space<vmem>>, vector<1x128xf32>
    %18 = vector.broadcast %17 : vector<1x128xf32> to vector<128x128xf32>
    %19 = arith.addf %16, %18 : vector<128x128xf32>
    %c0_16 = arith.constant 0 : index
    %c0_17 = arith.constant 0 : index
    %20 = vector.load %arg11[%c0_16, %c0_17] : memref<128x128xf32, #tpu.memory_space<vmem>>, vector<128x128xf32>
    tpu.vector_store %arg11[%c0_16, %c0_17], %19 {strides = array<i32>} : memref<128x128xf32, #tpu.memory_space<vmem>>, vector<128x128xf32>,
    %21 = arith.truncf %19 : vector<128x128xf32> to vector<128x128xbf16>
    %c0_18 = arith.constant 0 : index
    %c0_19 = arith.constant 0 : index
    %22 = vector.load %arg1[%c0_18, %c0_19] : memref<128x128xbf16, #tpu.memory_space<vmem>>, vector<128x128xbf16>
    %cst_20 = arith.constant dense<0.000000e+00> : vector<128x128xf32>
    %23 = tpu.matmul %22, %21, %cst_20 {dimension_numbers = #tpu.dot_dimension_numbers<[1], [0], [0], [1], [0, 0, 1, 1], [], []>} : vector<128x128xbf16>, vector<128x128xbf16>, vector<128x128xf32> -> vector<128x128xf32>
    %c0_21 = arith.constant 0 : index
    %c0_22 = arith.constant 0 : index
    %24 = vector.load %arg8[%c0_21, %c0_22] : memref<1x128xf32, #tpu.memory_space<vmem>>, vector<1x128xf32>
    %25 = vector.broadcast %24 : vector<1x128xf32> to vector<128x128xf32>
    %26 = arith.mulf %23, %25 : vector<128x128xf32>
    %c0_23 = arith.constant 0 : index
    %c0_24 = arith.constant 0 : index
    %27 = vector.load %arg9[%c0_23, %c0_24] : memref<1x128xf32, #tpu.memory_space<vmem>>, vector<1x128xf32>
    %28 = vector.broadcast %27 : vector<1x128xf32> to vector<128x128xf32>
    %29 = arith.mulf %19, %28 : vector<128x128xf32>
    %30 = arith.addf %26, %29 : vector<128x128xf32>
    %cst_25 = arith.constant dense<0.000000e+00> : vector<128xf32>
    %31 = vector.multi_reduction <add>, %30, %cst_25 [1] : vector<128x128xf32> to vector<128xf32>
    %32 = vector.shape_cast %31 : vector<128xf32> to vector<128x1xf32>
    %c0_26 = arith.constant 0 : index
    %c0_27 = arith.constant 0 : index
    %33 = memref.load %arg10[%c0_26, %c0_27] : memref<1x1xf32, #tpu.memory_space<smem>>
    %34 = vector.broadcast %33 : f32 to vector<128x1xf32>
    %35 = arith.addf %32, %34 : vector<128x1xf32>
    %36 = math.tanh %35 : vector<128x1xf32>
    %c0_28 = arith.constant 0 : index
    %c0_29 = arith.constant 0 : index
    %37 = vector.load %arg12[%c0_28, %c0_29] : memref<128x1xf32, #tpu.memory_space<vmem>>, vector<128x1xf32>
    tpu.vector_store %arg12[%c0_28, %c0_29], %36 {strides = array<i32>} : memref<128x1xf32, #tpu.memory_space<vmem>>, vector<128x1xf32>,
    return
  }
}

</mosaic_0001>

<llo_original>
// kernel: tpu_custom_call.1
$region0: #{tpu_custom_call.1}
  #allocation0 [shape = 'u32[]', space=smem, size = 0x4, offset = 0x4, fixed_abs, tag = 'smem constant byte address 0x4 - core index']
  #allocation1 [shape = 'u32[144,128]{1,0:T(1,128)}', space=vmem, size = 0x12000, scoped, tag = 'internal scratch']
  #allocation2 [shape = 'f32[1,1]{1,0:T(1,128)S(6)}', space=smem, size = 0x200, scoped, tag = 'scoped memory for tpu_custom_call.1']
  %s0 = inlined_call_operand.hbm [shape: bf16[128,128], index: 0, kind: input, shape index: {}]
  %s1 = inlined_call_operand.hbm [shape: bf16[128,128], index: 1, kind: input, shape index: {}]
  %s2 = inlined_call_operand.hbm [shape: bf16[128,128], index: 2, kind: input, shape index: {}]
  %s3 = inlined_call_operand.hbm [shape: bf16[128,128], index: 3, kind: input, shape index: {}]
  %s4 = inlined_call_operand.hbm [shape: bf16[128,128], index: 4, kind: input, shape index: {}]
  %s5 = inlined_call_operand.vmem [shape: f32[1,128], index: 5, kind: input, shape index: {}]
  %s6 = inlined_call_operand.vmem [shape: f32[1,128], index: 6, kind: input, shape index: {}]
  %s7 = inlined_call_operand.vmem [shape: f32[1,128], index: 7, kind: input, shape index: {}]
  %s8 = inlined_call_operand.vmem [shape: f32[1,128], index: 8, kind: input, shape index: {}]
  %s9 = inlined_call_operand.vmem [shape: f32[1,128], index: 9, kind: input, shape index: {}]
  %s10 = inlined_call_operand.<no memory space> [shape: f32[1,1], index: 10, kind: input, shape index: {}]
  %s11 = inlined_call_operand.hbm [shape: f32[128,128], index: 11, kind: output, shape index: {0}]
  %s12 = inlined_call_operand.vmem [shape: f32[128,1], index: 12, kind: output, shape index: {1}]
  %13 = xla_tuple %s11, %s12
  %s14 = sld [smem:[#allocation0]]
  $region82: #{tpu_custom_call.1} parent=0
    _
  %s16 = ssub.s32 1, %s14
  %s17 = scalar_select 0, %s16, %s14
  %18 = sst [smem:[#allocation2]] %s10
  $region1: #{tpu_custom_call.1} parent=0
    #allocation3 [shape = 'u8[32768]{0}', space=vmem, size = 0x8000, scoped, tag = 'input window, operand 0, single buffered']
    #allocation4 [shape = 's32[1]{0}', space=sflag, size = 0x4, scoped, tag = 'scoped memory for tpu_custom_call.1']
    #allocation5 [shape = 's32[1]{0}', space=sflag, size = 0x4, scoped, tag = 'scoped memory for tpu_custom_call.1']
    #allocation6 [shape = 'u8[32768]{0}', space=vmem, size = 0x8000, scoped, tag = 'input window, operand 1, single buffered']
    #allocation7 [shape = 's32[1]{0}', space=sflag, size = 0x4, scoped, tag = 'scoped memory for tpu_custom_call.1']
    #allocation8 [shape = 'u8[32768]{0}', space=vmem, size = 0x8000, scoped, tag = 'input window, operand 2, single buffered']
    #allocation9 [shape = 'u8[32768]{0}', space=vmem, size = 0x8000, scoped, tag = 'input window, operand 3, single buffered']
    #allocation10 [shape = 's32[1]{0}', space=sflag, size = 0x4, scoped, tag = 'scoped memory for tpu_custom_call.1']
    #allocation11 [shape = 'u8[32768]{0}', space=vmem, size = 0x8000, scoped, tag = 'input window, operand 4, single buffered']
    #allocation12 [shape = 'u8[65536]{0}', space=vmem, size = 0x10000, scoped, tag = 'output window, operand 0, single buffered']
    %19 = vsyncpa [#allocation4], 0
    %20 = vsyncpa [#allocation7], 0
    %21 = vsyncpa [#allocation10], 0
    %22 = vsyncpa [#allocation5], 0
    // Predicated region
    $region2: #{tpu_custom_call.1} parent=1 // pred_check
      _
    $region3: #{tpu_custom_call.1} parent=1 // pred_check_branch
      %24 = sbr.rel (0) target = $region5
    $region4: #{tpu_custom_call.1} parent=1 // pred_region
      %s26 = ssub.s32 1024, 1024
      %27 = vsyncadd [#allocation4], %s26
      %s28 = sshll.u32 [#allocation3], 4
      %s29 = int_to_ptr.vmem [resolvable:$true] %s28
      %34 = dma.hbm_to_vmem [thread:$0]  %s0, 1024, %s29, [#allocation4], 64, 64, 4
    $region5: #{tpu_custom_call.1} parent=1 // pred_fallthru
      _
    // Predicated region
    $region6: #{tpu_custom_call.1} parent=1 // pred_check
      _
    $region7: #{tpu_custom_call.1} parent=1 // pred_check_branch
      %36 = sbr.rel (0) target = $region9
    $region8: #{tpu_custom_call.1} parent=1 // pred_region
      %s38 = ssub.s32 1024, 1024
      %39 = vsyncadd [#allocation7], %s38
      %s40 = sshll.u32 [#allocation6], 4
      %s41 = int_to_ptr.vmem [resolvable:$true] %s40
      %46 = dma.hbm_to_vmem [thread:$0]  %s1, 1024, %s41, [#allocation7], 64, 64, 4
    $region9: #{tpu_custom_call.1} parent=1 // pred_fallthru
      _
    // Predicated region
    $region10: #{tpu_custom_call.1} parent=1 // pred_check
      _
    $region11: #{tpu_custom_call.1} parent=1 // pred_check_branch
      %48 = sbr.rel (0) target = $region13
    $region12: #{tpu_custom_call.1} parent=1 // pred_region
      %s50 = ssub.s32 1024, 1024
      %51 = vsyncadd [#allocation7], %s50
      %s52 = sshll.u32 [#allocation8], 4
      %s53 = int_to_ptr.vmem [resolvable:$true] %s52
      %58 = dma.hbm_to_vmem [thread:$0]  %s2, 1024, %s53, [#allocation7], 64, 64, 4
    $region13: #{tpu_custom_call.1} parent=1 // pred_fallthru
      _
    // Predicated region
    $region14: #{tpu_custom_call.1} parent=1 // pred_check
      _
    $region15: #{tpu_custom_call.1} parent=1 // pred_check_branch
      %60 = sbr.rel (0) target = $region17
    $region16: #{tpu_custom_call.1} parent=1 // pred_region
      %s62 = ssub.s32 1024, 1024
      %63 = vsyncadd [#allocation10], %s62
      %s64 = sshll.u32 [#allocation9], 4
      %s65 = int_to_ptr.vmem [resolvable:$true] %s64
      %70 = dma.hbm_to_vmem [thread:$0]  %s3, 1024, %s65, [#allocation10], 64, 64, 4
    $region17: #{tpu_custom_call.1} parent=1 // pred_fallthru
      _
    // Predicated region
    $region18: #{tpu_custom_call.1} parent=1 // pred_check
      _
    $region19: #{tpu_custom_call.1} parent=1 // pred_check_branch
      %72 = sbr.rel (0) target = $region21
    $region20: #{tpu_custom_call.1} parent=1 // pred_region
      %s74 = ssub.s32 1024, 1024
      %75 = vsyncadd [#allocation10], %s74
      %s76 = sshll.u32 [#allocation11], 4
      %s77 = int_to_ptr.vmem [resolvable:$true] %s76
      %82 = dma.hbm_to_vmem [thread:$0]  %s4, 1024, %s77, [#allocation10], 64, 64, 4
    $region21: #{tpu_custom_call.1} parent=1 // pred_fallthru
      _
    // Predicated region
    $region22: #{tpu_custom_call.1} parent=1 // pred_check
      _
    $region23: #{tpu_custom_call.1} parent=1 // pred_check_branch
      %84 = sbr.rel (0) target = $region25
    $region24: #{tpu_custom_call.1} parent=1 // pred_region
      _
    $region25: #{tpu_custom_call.1} parent=1 // pred_fallthru
      _
    // Predicated region
    $region26: #{tpu_custom_call.1} parent=1 // pred_check
      _
    $region27: #{tpu_custom_call.1} parent=1 // pred_check_branch
      %86 = sbr.rel (0) target = $region29
    $region28: #{tpu_custom_call.1} parent=1 // pred_region
      _
    $region29: #{tpu_custom_call.1} parent=1 // pred_fallthru
      _
    // Predicated region
    $region30: #{tpu_custom_call.1} parent=1 // pred_check
      _
    $region31: #{tpu_custom_call.1} parent=1 // pred_check_branch
      %88 = sbr.rel (0) target = $region33
    $region32: #{tpu_custom_call.1} parent=1 // pred_region
      _
    $region33: #{tpu_custom_call.1} parent=1 // pred_fallthru
      _
    // Predicated region
    $region34: #{tpu_custom_call.1} parent=1 // pred_check
      _
    $region35: #{tpu_custom_call.1} parent=1 // pred_check_branch
      %90 = sbr.rel (0) target = $region37
    $region36: #{tpu_custom_call.1} parent=1 // pred_region
      _
    $region37: #{tpu_custom_call.1} parent=1 // pred_fallthru
      _
    // Predicated region
    $region38: #{tpu_custom_call.1} parent=1 // pred_check
      _
    $region39: #{tpu_custom_call.1} parent=1 // pred_check_branch
      %92 = sbr.rel (0) target = $region41
    $region40: #{tpu_custom_call.1} parent=1 // pred_region
      _
    $region41: #{tpu_custom_call.1} parent=1 // pred_fallthru
      _
    // Predicated region
    $region42: #{tpu_custom_call.1} parent=1 // pred_check
      _
    $region43: #{tpu_custom_call.1} parent=1 // pred_check_branch
      %94 = sbr.rel (0) target = $region45
    $region44: #{tpu_custom_call.1} parent=1 // pred_region
      _
    $region45: #{tpu_custom_call.1} parent=1 // pred_fallthru
      _
    // Predicated region
    $region46: #{tpu_custom_call.1} parent=1 // pred_check
      _
    $region47: #{tpu_custom_call.1} parent=1 // pred_check_branch
      %96 = sbr.rel (0) target = $region49
    $region48: #{tpu_custom_call.1} parent=1 // pred_region
      %97 = dma.done [#allocation4], 1024
    $region49: #{tpu_custom_call.1} parent=1 // pred_fallthru
      _
    // Predicated region
    $region50: #{tpu_custom_call.1} parent=1 // pred_check
      _
    $region51: #{tpu_custom_call.1} parent=1 // pred_check_branch
      %99 = sbr.rel (0) target = $region53
    $region52: #{tpu_custom_call.1} parent=1 // pred_region
      %100 = dma.done [#allocation7], 1024
    $region53: #{tpu_custom_call.1} parent=1 // pred_fallthru
      _
    // Predicated region
    $region54: #{tpu_custom_call.1} parent=1 // pred_check
      _
    $region55: #{tpu_custom_call.1} parent=1 // pred_check_branch
      %102 = sbr.rel (0) target = $region57
    $region56: #{tpu_custom_call.1} parent=1 // pred_region
      %103 = dma.done [#allocation7], 1024
    $region57: #{tpu_custom_call.1} parent=1 // pred_fallthru
      _
    // Predicated region
    $region58: #{tpu_custom_call.1} parent=1 // pred_check
      _
    $region59: #{tpu_custom_call.1} parent=1 // pred_check_branch
      %105 = sbr.rel (0) target = $region61
    $region60: #{tpu_custom_call.1} parent=1 // pred_region
      %106 = dma.done [#allocation10], 1024
    $region61: #{tpu_custom_call.1} parent=1 // pred_fallthru
      _
    // Predicated region
    $region62: #{tpu_custom_call.1} parent=1 // pred_check
      _
    $region63: #{tpu_custom_call.1} parent=1 // pred_check_branch
      %108 = sbr.rel (0) target = $region65
    $region64: #{tpu_custom_call.1} parent=1 // pred_region
      %109 = dma.done [#allocation10], 1024
    $region65: #{tpu_custom_call.1} parent=1 // pred_fallthru
      _
    %v111 = vld [vmem:[#allocation8] sm:$0xf]
    %v112 = vld [vmem:[#allocation8 + $0x4] sm:$0xf]
    %v113 = vld [vmem:[#allocation8 + $0x8] sm:$0xf]
    %v114 = vld [vmem:[#allocation8 + $0xc] sm:$0xf]
    %v115 = vld [vmem:[#allocation8 + $0x10] sm:$0xf]
    %v116 = vld [vmem:[#allocation8 + $0x14] sm:$0xf]
    %v117 = vld [vmem:[#allocation8 + $0x18] sm:$0xf]
    %v118 = vld [vmem:[#allocation8 + $0x1c] sm:$0xf]
    %v119 = vld [vmem:[#allocation8 + $0x20] sm:$0xf]
    %v120 = vld [vmem:[#allocation8 + $0x24] sm:$0xf]
    %v121 = vld [vmem:[#allocation8 + $0x28] sm:$0xf]
    %v122 = vld [vmem:[#allocation8 + $0x2c] sm:$0xf]
    %v123 = vld [vmem:[#allocation8 + $0x30] sm:$0xf]
    %v124 = vld [vmem:[#allocation8 + $0x34] sm:$0xf]
    %v125 = vld [vmem:[#allocation8 + $0x38] sm:$0xf]
    %v126 = vld [vmem:[#allocation8 + $0x3c] sm:$0xf]
    %v127 = vld [vmem:[#allocation9] sm:$0xf]
    %v128 = vld [vmem:[#allocation9 + $0x4] sm:$0xf]
    %v129 = vld [vmem:[#allocation9 + $0x8] sm:$0xf]
    %v130 = vld [vmem:[#allocation9 + $0xc] sm:$0xf]
    %v131 = vld [vmem:[#allocation9 + $0x10] sm:$0xf]
    %v132 = vld [vmem:[#allocation9 + $0x14] sm:$0xf]
    %v133 = vld [vmem:[#allocation9 + $0x18] sm:$0xf]
    %v134 = vld [vmem:[#allocation9 + $0x1c] sm:$0xf]
    %v135 = vld [vmem:[#allocation9 + $0x20] sm:$0xf]
    %v136 = vld [vmem:[#allocation9 + $0x24] sm:$0xf]
    %v137 = vld [vmem:[#allocation9 + $0x28] sm:$0xf]
    %v138 = vld [vmem:[#allocation9 + $0x2c] sm:$0xf]
    %v139 = vld [vmem:[#allocation9 + $0x30] sm:$0xf]
    %v140 = vld [vmem:[#allocation9 + $0x34] sm:$0xf]
    %v141 = vld [vmem:[#allocation9 + $0x38] sm:$0xf]
    %v142 = vld [vmem:[#allocation9 + $0x3c] sm:$0xf]
    %v159 = vunpack.c.l.b16 %v111
    %v160 = vunpack.c.l.b16 %v112
    %v161 = vunpack.c.l.b16 %v113
    %v162 = vunpack.c.l.b16 %v114
    %v163 = vunpack.c.l.b16 %v115
    %v164 = vunpack.c.l.b16 %v116
    %v165 = vunpack.c.l.b16 %v117
    %v166 = vunpack.c.l.b16 %v118
    %v167 = vunpack.c.l.b16 %v119
    %v168 = vunpack.c.l.b16 %v120
    %v169 = vunpack.c.l.b16 %v121
    %v170 = vunpack.c.l.b16 %v122
    %v171 = vunpack.c.l.b16 %v123
    %v172 = vunpack.c.l.b16 %v124
    %v173 = vunpack.c.l.b16 %v125
    %v174 = vunpack.c.l.b16 %v126
    %v175 = vpack.c.b16 %v160, %v159
    %v176 = vpack.c.b16 %v162, %v161
    %v177 = vpack.c.b16 %v164, %v163
    %v178 = vpack.c.b16 %v166, %v165
    %v179 = vpack.c.b16 %v168, %v167
    %v180 = vpack.c.b16 %v170, %v169
    %v181 = vpack.c.b16 %v172, %v171
    %v182 = vpack.c.b16 %v174, %v173
    %v207 = vunpack.c.l.b16 %v127
    %v208 = vunpack.c.l.b16 %v128
    %v209 = vunpack.c.l.b16 %v129
    %v210 = vunpack.c.l.b16 %v130
    %v211 = vunpack.c.l.b16 %v131
    %v212 = vunpack.c.l.b16 %v132
    %v213 = vunpack.c.l.b16 %v133
    %v214 = vunpack.c.l.b16 %v134
    %v215 = vunpack.c.l.b16 %v135
    %v216 = vunpack.c.l.b16 %v136
    %v217 = vunpack.c.l.b16 %v137
    %v218 = vunpack.c.l.b16 %v138
    %v219 = vunpack.c.l.b16 %v139
    %v220 = vunpack.c.l.b16 %v140
    %v221 = vunpack.c.l.b16 %v141
    %v222 = vunpack.c.l.b16 %v142
    %v223 = vpack.c.b16 %v208, %v207
    %v224 = vpack.c.b16 %v210, %v209
    %v225 = vpack.c.b16 %v212, %v211
    %v226 = vpack.c.b16 %v214, %v213
    %v227 = vpack.c.b16 %v216, %v215
    %v228 = vpack.c.b16 %v218, %v217
    %v229 = vpack.c.b16 %v220, %v219
    %v230 = vpack.c.b16 %v222, %v221
    %239 = vmatprep.subr.bf16.mxu0 0
    %240 = vmatpush1.bf16.msra.mxu0 %v223
    %241 = vmatprep.subr.bf16.mxu0 0
    %242 = vmatpush1.bf16.msra.mxu0 %v224
    %243 = vmatprep.subr.bf16.mxu0 0
    %244 = vmatpush1.bf16.msra.mxu0 %v225
    %245 = vmatprep.subr.bf16.mxu0 0
    %246 = vmatpush1.bf16.msra.mxu0 %v226
    %247 = vmatprep.subr.bf16.mxu0 0
    %248 = vmatpush1.bf16.msra.mxu0 %v227
    %249 = vmatprep.subr.bf16.mxu0 0
    %250 = vmatpush1.bf16.msra.mxu0 %v228
    %251 = vmatprep.subr.bf16.mxu0 0
    %252 = vmatpush1.bf16.msra.mxu0 %v229
    %253 = vmatprep.subr.bf16.mxu0 0
    %254 = vmatpush1.bf16.msra.mxu0 %v230
    %255 = vmatprep.subr.bf16.mxu0 0
    %256 = vmatpush1.bf16.msra.mxu0 0
    %257 = vmatprep.subr.bf16.mxu0 0
    %258 = vmatpush1.bf16.msra.mxu0 0
    %259 = vmatprep.subr.bf16.mxu0 0
    %260 = vmatpush1.bf16.msra.mxu0 0
    %261 = vmatprep.subr.bf16.mxu0 0
    %262 = vmatpush1.bf16.msra.mxu0 0
    %263 = vmatprep.subr.bf16.mxu0 0
    %264 = vmatpush1.bf16.msra.mxu0 0
    %265 = vmatprep.subr.bf16.mxu0 0
    %266 = vmatpush1.bf16.msra.mxu0 0
    %267 = vmatprep.subr.bf16.mxu0 0
    %268 = vmatpush1.bf16.msra.mxu0 0
    %269 = vmatprep.subr.bf16.mxu0 0
    %270 = vmatpush1.bf16.msra.mxu0 0
    %271 = vmatprep.mubr.bf16.mxu0 0
    %272 = vmatmul.mubr.bf16.gmra.mrb[0].mxu0 %v175
    %v273 = vpop.f32.mrb[0].mxu0
    %v274 = vadd.f32 0.0, %v273
    %v275 = vpop.f32.mrb[0].mxu0
    %v276 = vpop.f32.mrb[0].mxu0
    %v277 = vadd.f32 0.0, %v276
    %v278 = vpop.f32.mrb[0].mxu0
    %279 = vmatprep.mubr.bf16.mxu0 0
    %280 = vmatmul.mubr.bf16.gmra.mrb[0].mxu0 %v176
    %v281 = vpop.f32.mrb[0].mxu0
    %v282 = vadd.f32 0.0, %v281
    %v283 = vpop.f32.mrb[0].mxu0
    %v284 = vpop.f32.mrb[0].mxu0
    %v285 = vadd.f32 0.0, %v284
    %v286 = vpop.f32.mrb[0].mxu0
    %287 = vmatprep.mubr.bf16.mxu0 0
    %288 = vmatmul.mubr.bf16.gmra.mrb[0].mxu0 %v177
    %v289 = vpop.f32.mrb[0].mxu0
    %v290 = vadd.f32 0.0, %v289
    %v291 = vpop.f32.mrb[0].mxu0
    %v292 = vpop.f32.mrb[0].mxu0
    %v293 = vadd.f32 0.0, %v292
    %v294 = vpop.f32.mrb[0].mxu0
    %295 = vmatprep.mubr.bf16.mxu0 0
    %296 = vmatmul.mubr.bf16.gmra.mrb[0].mxu0 %v178
    %v297 = vpop.f32.mrb[0].mxu0
    %v298 = vadd.f32 0.0, %v297
    %v299 = vpop.f32.mrb[0].mxu0
    %v300 = vpop.f32.mrb[0].mxu0
    %v301 = vadd.f32 0.0, %v300
    %v302 = vpop.f32.mrb[0].mxu0
    %303 = vmatprep.mubr.bf16.mxu0 0
    %304 = vmatmul.mubr.bf16.gmra.mrb[0].mxu0 %v179
    %v305 = vpop.f32.mrb[0].mxu0
    %v306 = vadd.f32 0.0, %v305
    %v307 = vpop.f32.mrb[0].mxu0
    %v308 = vpop.f32.mrb[0].mxu0
    %v309 = vadd.f32 0.0, %v308
    %v310 = vpop.f32.mrb[0].mxu0
    %311 = vmatprep.mubr.bf16.mxu0 0
    %312 = vmatmul.mubr.bf16.gmra.mrb[0].mxu0 %v180
    %v313 = vpop.f32.mrb[0].mxu0
    %v314 = vadd.f32 0.0, %v313
    %v315 = vpop.f32.mrb[0].mxu0
    %v316 = vpop.f32.mrb[0].mxu0
    %v317 = vadd.f32 0.0, %v316
    %v318 = vpop.f32.mrb[0].mxu0
    %319 = vmatprep.mubr.bf16.mxu0 0
    %320 = vmatmul.mubr.bf16.gmra.mrb[0].mxu0 %v181
    %v321 = vpop.f32.mrb[0].mxu0
    %v322 = vadd.f32 0.0, %v321
    %v323 = vpop.f32.mrb[0].mxu0
    %v324 = vpop.f32.mrb[0].mxu0
    %v325 = vadd.f32 0.0, %v324
    %v326 = vpop.f32.mrb[0].mxu0
    %327 = vmatprep.mubr.bf16.mxu0 0
    %328 = vmatmul.mubr.bf16.gmra.mrb[0].mxu0 %v182
    %v329 = vpop.f32.mrb[0].mxu0
    %v330 = vadd.f32 0.0, %v329
    %v331 = vpop.f32.mrb[0].mxu0
    %v332 = vpop.f32.mrb[0].mxu0
    %v333 = vadd.f32 0.0, %v332
    %v334 = vpop.f32.mrb[0].mxu0
    %335 = vdwg.mxu0
    %v336 = vld [vmem:[#allocation3] sm:$0xf]
    %v337 = vld [vmem:[#allocation3 + $0x4] sm:$0xf]
    %v338 = vld [vmem:[#allocation3 + $0x8] sm:$0xf]
    %v339 = vld [vmem:[#allocation3 + $0xc] sm:$0xf]
    %v340 = vld [vmem:[#allocation3 + $0x10] sm:$0xf]
    %v341 = vld [vmem:[#allocation3 + $0x14] sm:$0xf]
    %v342 = vld [vmem:[#allocation3 + $0x18] sm:$0xf]
    %v343 = vld [vmem:[#allocation3 + $0x1c] sm:$0xf]
    %v344 = vld [vmem:[#allocation3 + $0x20] sm:$0xf]
    %v345 = vld [vmem:[#allocation3 + $0x24] sm:$0xf]
    %v346 = vld [vmem:[#allocation3 + $0x28] sm:$0xf]
    %v347 = vld [vmem:[#allocation3 + $0x2c] sm:$0xf]
    %v348 = vld [vmem:[#allocation3 + $0x30] sm:$0xf]
    %v349 = vld [vmem:[#allocation3 + $0x34] sm:$0xf]
    %v350 = vld [vmem:[#allocation3 + $0x38] sm:$0xf]
    %v351 = vld [vmem:[#allocation3 + $0x3c] sm:$0xf]
    %v352 = vpack.c.bf16 %v277, %v274
    %v353 = vpack.c.bf16 %v285, %v282
    %v354 = vpack.c.bf16 %v293, %v290
    %v355 = vpack.c.bf16 %v301, %v298
    %v356 = vpack.c.bf16 %v309, %v306
    %v357 = vpack.c.bf16 %v317, %v314
    %v358 = vpack.c.bf16 %v325, %v322
    %v359 = vpack.c.bf16 %v333, %v330
    %v376 = vunpack.c.l.b16 %v336
    %v377 = vunpack.c.l.b16 %v337
    %v378 = vunpack.c.l.b16 %v338
    %v379 = vunpack.c.l.b16 %v339
    %v380 = vunpack.c.l.b16 %v340
    %v381 = vunpack.c.l.b16 %v341
    %v382 = vunpack.c.l.b16 %v342
    %v383 = vunpack.c.l.b16 %v343
    %v384 = vunpack.c.l.b16 %v344
    %v385 = vunpack.c.l.b16 %v345
    %v386 = vunpack.c.l.b16 %v346
    %v387 = vunpack.c.l.b16 %v347
    %v388 = vunpack.c.l.b16 %v348
    %v389 = vunpack.c.l.b16 %v349
    %v390 = vunpack.c.l.b16 %v350
    %v391 = vunpack.c.l.b16 %v351
    %v392 = vpack.c.b16 %v377, %v376
    %v393 = vpack.c.b16 %v379, %v378
    %v394 = vpack.c.b16 %v381, %v380
    %v395 = vpack.c.b16 %v383, %v382
    %v396 = vpack.c.b16 %v385, %v384
    %v397 = vpack.c.b16 %v387, %v386
    %v398 = vpack.c.b16 %v389, %v388
    %v399 = vpack.c.b16 %v391, %v390
    %408 = vmatprep.subr.bf16.mxu0 0
    %409 = vmatpush1.bf16.msra.mxu0 %v352
    %410 = vmatprep.subr.bf16.mxu0 0
    %411 = vmatpush1.bf16.msra.mxu0 %v353
    %412 = vmatprep.subr.bf16.mxu0 0
    %413 = vmatpush1.bf16.msra.mxu0 %v354
    %414 = vmatprep.subr.bf16.mxu0 0
    %415 = vmatpush1.bf16.msra.mxu0 %v355
    %416 = vmatprep.subr.bf16.mxu0 0
    %417 = vmatpush1.bf16.msra.mxu0 %v356
    %418 = vmatprep.subr.bf16.mxu0 0
    %419 = vmatpush1.bf16.msra.mxu0 %v357
    %420 = vmatprep.subr.bf16.mxu0 0
    %421 = vmatpush1.bf16.msra.mxu0 %v358
    %422 = vmatprep.subr.bf16.mxu0 0
    %423 = vmatpush1.bf16.msra.mxu0 %v359
    %424 = vmatprep.subr.bf16.mxu0 0
    %425 = vmatpush1.bf16.msra.mxu0 0
    %426 = vmatprep.subr.bf16.mxu0 0
    %427 = vmatpush1.bf16.msra.mxu0 0
    %428 = vmatprep.subr.bf16.mxu0 0
    %429 = vmatpush1.bf16.msra.mxu0 0
    %430 = vmatprep.subr.bf16.mxu0 0
    %431 = vmatpush1.bf16.msra.mxu0 0
    %432 = vmatprep.subr.bf16.mxu0 0
    %433 = vmatpush1.bf16.msra.mxu0 0
    %434 = vmatprep.subr.bf16.mxu0 0
    %435 = vmatpush1.bf16.msra.mxu0 0
    %436 = vmatprep.subr.bf16.mxu0 0
    %437 = vmatpush1.bf16.msra.mxu0 0
    %438 = vmatprep.subr.bf16.mxu0 0
    %439 = vmatpush1.bf16.msra.mxu0 0
    %440 = vmatprep.mubr.bf16.mxu0 0
    %441 = vmatmul.mubr.bf16.gmra.mrb[0].mxu0 %v392
    %v442 = vpop.f32.mrb[0].mxu0
    %v443 = vadd.f32 0.0, %v442
    %v444 = vpop.f32.mrb[0].mxu0
    %v445 = vpop.f32.mrb[0].mxu0
    %v446 = vadd.f32 0.0, %v445
    %v447 = vpop.f32.mrb[0].mxu0
    %448 = vmatprep.mubr.bf16.mxu0 0
    %449 = vmatmul.mubr.bf16.gmra.mrb[0].mxu0 %v393
    %v450 = vpop.f32.mrb[0].mxu0
    %v451 = vadd.f32 0.0, %v450
    %v452 = vpop.f32.mrb[0].mxu0
    %v453 = vpop.f32.mrb[0].mxu0
    %v454 = vadd.f32 0.0, %v453
    %v455 = vpop.f32.mrb[0].mxu0
    %456 = vmatprep.mubr.bf16.mxu0 0
    %457 = vmatmul.mubr.bf16.gmra.mrb[0].mxu0 %v394
    %v458 = vpop.f32.mrb[0].mxu0
    %v459 = vadd.f32 0.0, %v458
    %v460 = vpop.f32.mrb[0].mxu0
    %v461 = vpop.f32.mrb[0].mxu0
    %v462 = vadd.f32 0.0, %v461
    %v463 = vpop.f32.mrb[0].mxu0
    %464 = vmatprep.mubr.bf16.mxu0 0
    %465 = vmatmul.mubr.bf16.gmra.mrb[0].mxu0 %v395
    %v466 = vpop.f32.mrb[0].mxu0
    %v467 = vadd.f32 0.0, %v466
    %v468 = vpop.f32.mrb[0].mxu0
    %v469 = vpop.f32.mrb[0].mxu0
    %v470 = vadd.f32 0.0, %v469
    %v471 = vpop.f32.mrb[0].mxu0
    %472 = vmatprep.mubr.bf16.mxu0 0
    %473 = vmatmul.mubr.bf16.gmra.mrb[0].mxu0 %v396
    %v474 = vpop.f32.mrb[0].mxu0
    %v475 = vadd.f32 0.0, %v474
    %v476 = vpop.f32.mrb[0].mxu0
    %v477 = vpop.f32.mrb[0].mxu0
    %v478 = vadd.f32 0.0, %v477
    %v479 = vpop.f32.mrb[0].mxu0
    %480 = vmatprep.mubr.bf16.mxu0 0
    %481 = vmatmul.mubr.bf16.gmra.mrb[0].mxu0 %v397
    %v482 = vpop.f32.mrb[0].mxu0
    %v483 = vadd.f32 0.0, %v482
    %v484 = vpop.f32.mrb[0].mxu0
    %v485 = vpop.f32.mrb[0].mxu0
    %v486 = vadd.f32 0.0, %v485
    %v487 = vpop.f32.mrb[0].mxu0
    %488 = vmatprep.mubr.bf16.mxu0 0
    %489 = vmatmul.mubr.bf16.gmra.mrb[0].mxu0 %v398
    %v490 = vpop.f32.mrb[0].mxu0
    %v491 = vadd.f32 0.0, %v490
    %v492 = vpop.f32.mrb[0].mxu0
    %v493 = vpop.f32.mrb[0].mxu0
    %v494 = vadd.f32 0.0, %v493
    %v495 = vpop.f32.mrb[0].mxu0
    %496 = vmatprep.mubr.bf16.mxu0 0
    %497 = vmatmul.mubr.bf16.gmra.mrb[0].mxu0 %v399
    %v498 = vpop.f32.mrb[0].mxu0
    %v499 = vadd.f32 0.0, %v498
    %v500 = vpop.f32.mrb[0].mxu0
    %v501 = vpop.f32.mrb[0].mxu0
    %v502 = vadd.f32 0.0, %v501
    %v503 = vpop.f32.mrb[0].mxu0
    %504 = vdwg.mxu0
    %v505 = vpack.c.bf16 %v446, %v443
    %v506 = vpack.c.bf16 %v454, %v451
    %v507 = vpack.c.bf16 %v462, %v459
    %v508 = vpack.c.bf16 %v470, %v467
    %v509 = vpack.c.bf16 %v478, %v475
    %v510 = vpack.c.bf16 %v486, %v483
    %v511 = vpack.c.bf16 %v494, %v491
    %v512 = vpack.c.bf16 %v502, %v499
    %v513 = vld [vmem:[#allocation11] sm:$0xf]
    %v514 = vld [vmem:[#allocation11 + $0x4] sm:$0xf]
    %v515 = vld [vmem:[#allocation11 + $0x8] sm:$0xf]
    %v516 = vld [vmem:[#allocation11 + $0xc] sm:$0xf]
    %v517 = vld [vmem:[#allocation11 + $0x10] sm:$0xf]
    %v518 = vld [vmem:[#allocation11 + $0x14] sm:$0xf]
    %v519 = vld [vmem:[#allocation11 + $0x18] sm:$0xf]
    %v520 = vld [vmem:[#allocation11 + $0x1c] sm:$0xf]
    %v521 = vld [vmem:[#allocation11 + $0x20] sm:$0xf]
    %v522 = vld [vmem:[#allocation11 + $0x24] sm:$0xf]
    %v523 = vld [vmem:[#allocation11 + $0x28] sm:$0xf]
    %v524 = vld [vmem:[#allocation11 + $0x2c] sm:$0xf]
    %v525 = vld [vmem:[#allocation11 + $0x30] sm:$0xf]
    %v526 = vld [vmem:[#allocation11 + $0x34] sm:$0xf]
    %v527 = vld [vmem:[#allocation11 + $0x38] sm:$0xf]
    %v528 = vld [vmem:[#allocation11 + $0x3c] sm:$0xf]
    %v529 = vld [vmem:[%s5] sm:$0x1]
    %v531 = vlaneseq
    %v532 = vshrl.u32 %v531, 7
    %v533 = vsub.s32 0, %v532
    %v534 = vrot.slane %v529, %v533
    %v552 = vunpack.c.l.b16 %v513
    %v553 = vunpack.c.l.b16 %v514
    %v554 = vunpack.c.l.b16 %v515
    %v555 = vunpack.c.l.b16 %v516
    %v556 = vunpack.c.l.b16 %v517
    %v557 = vunpack.c.l.b16 %v518
    %v558 = vunpack.c.l.b16 %v519
    %v559 = vunpack.c.l.b16 %v520
    %v560 = vunpack.c.l.b16 %v521
    %v561 = vunpack.c.l.b16 %v522
    %v562 = vunpack.c.l.b16 %v523
    %v563 = vunpack.c.l.b16 %v524
    %v564 = vunpack.c.l.b16 %v525
    %v565 = vunpack.c.l.b16 %v526
    %v566 = vunpack.c.l.b16 %v527
    %v567 = vunpack.c.l.b16 %v528
    %v568 = vpack.c.b16 %v553, %v552
    %v569 = vpack.c.b16 %v555, %v554
    %v570 = vpack.c.b16 %v557, %v556
    %v571 = vpack.c.b16 %v559, %v558
    %v572 = vpack.c.b16 %v561, %v560
    %v573 = vpack.c.b16 %v563, %v562
    %v574 = vpack.c.b16 %v565, %v564
    %v575 = vpack.c.b16 %v567, %v566
    %584 = vmatprep.subr.bf16.mxu0 0
    %585 = vmatpush1.bf16.msra.mxu0 %v568
    %586 = vmatprep.subr.bf16.mxu0 0
    %587 = vmatpush1.bf16.msra.mxu0 %v569
    %588 = vmatprep.subr.bf16.mxu0 0
    %589 = vmatpush1.bf16.msra.mxu0 %v570
    %590 = vmatprep.subr.bf16.mxu0 0
    %591 = vmatpush1.bf16.msra.mxu0 %v571
    %592 = vmatprep.subr.bf16.mxu0 0
    %593 = vmatpush1.bf16.msra.mxu0 %v572
    %594 = vmatprep.subr.bf16.mxu0 0
    %595 = vmatpush1.bf16.msra.mxu0 %v573
    %596 = vmatprep.subr.bf16.mxu0 0
    %597 = vmatpush1.bf16.msra.mxu0 %v574
    %598 = vmatprep.subr.bf16.mxu0 0
    %599 = vmatpush1.bf16.msra.mxu0 %v575
    %600 = vmatprep.subr.bf16.mxu0 0
    %601 = vmatpush1.bf16.msra.mxu0 0
    %602 = vmatprep.subr.bf16.mxu0 0
    %603 = vmatpush1.bf16.msra.mxu0 0
    %604 = vmatprep.subr.bf16.mxu0 0
    %605 = vmatpush1.bf16.msra.mxu0 0
    %606 = vmatprep.subr.bf16.mxu0 0
    %607 = vmatpush1.bf16.msra.mxu0 0
    %608 = vmatprep.subr.bf16.mxu0 0
    %609 = vmatpush1.bf16.msra.mxu0 0
    %610 = vmatprep.subr.bf16.mxu0 0
    %611 = vmatpush1.bf16.msra.mxu0 0
    %612 = vmatprep.subr.bf16.mxu0 0
    %613 = vmatpush1.bf16.msra.mxu0 0
    %614 = vmatprep.subr.bf16.mxu0 0
    %615 = vmatpush1.bf16.msra.mxu0 0
    %616 = vmatprep.mubr.bf16.mxu0 0
    %617 = vmatmul.mubr.bf16.gmra.mrb[0].mxu0 %v505
    %v618 = vpop.f32.mrb[0].mxu0
    %v619 = vadd.f32 %v534, %v618
    %v620 = vpop.f32.mrb[0].mxu0
    %v621 = vpop.f32.mrb[0].mxu0
    %v622 = vadd.f32 %v534, %v621
    %v623 = vpop.f32.mrb[0].mxu0
    %624 = vmatprep.mubr.bf16.mxu0 0
    %625 = vmatmul.mubr.bf16.gmra.mrb[0].mxu0 %v506
    %v626 = vpop.f32.mrb[0].mxu0
    %v627 = vadd.f32 %v534, %v626
    %v628 = vpop.f32.mrb[0].mxu0
    %v629 = vpop.f32.mrb[0].mxu0
    %v630 = vadd.f32 %v534, %v629
    %v631 = vpop.f32.mrb[0].mxu0
    %632 = vmatprep.mubr.bf16.mxu0 0
    %633 = vmatmul.mubr.bf16.gmra.mrb[0].mxu0 %v507
    %v634 = vpop.f32.mrb[0].mxu0
    %v635 = vadd.f32 %v534, %v634
    %v636 = vpop.f32.mrb[0].mxu0
    %v637 = vpop.f32.mrb[0].mxu0
    %v638 = vadd.f32 %v534, %v637
    %v639 = vpop.f32.mrb[0].mxu0
    %640 = vmatprep.mubr.bf16.mxu0 0
    %641 = vmatmul.mubr.bf16.gmra.mrb[0].mxu0 %v508
    %v642 = vpop.f32.mrb[0].mxu0
    %v643 = vadd.f32 %v534, %v642
    %v644 = vpop.f32.mrb[0].mxu0
    %v645 = vpop.f32.mrb[0].mxu0
    %v646 = vadd.f32 %v534, %v645
    %v647 = vpop.f32.mrb[0].mxu0
    %648 = vmatprep.mubr.bf16.mxu0 0
    %649 = vmatmul.mubr.bf16.gmra.mrb[0].mxu0 %v509
    %v650 = vpop.f32.mrb[0].mxu0
    %v651 = vadd.f32 %v534, %v650
    %v652 = vpop.f32.mrb[0].mxu0
    %v653 = vpop.f32.mrb[0].mxu0
    %v654 = vadd.f32 %v534, %v653
    %v655 = vpop.f32.mrb[0].mxu0
    %656 = vmatprep.mubr.bf16.mxu0 0
    %657 = vmatmul.mubr.bf16.gmra.mrb[0].mxu0 %v510
    %v658 = vpop.f32.mrb[0].mxu0
    %v659 = vadd.f32 %v534, %v658
    %v660 = vpop.f32.mrb[0].mxu0
    %v661 = vpop.f32.mrb[0].mxu0
    %v662 = vadd.f32 %v534, %v661
    %v663 = vpop.f32.mrb[0].mxu0
    %664 = vmatprep.mubr.bf16.mxu0 0
    %665 = vmatmul.mubr.bf16.gmra.mrb[0].mxu0 %v511
    %v666 = vpop.f32.mrb[0].mxu0
    %v667 = vadd.f32 %v534, %v666
    %v668 = vpop.f32.mrb[0].mxu0
    %v669 = vpop.f32.mrb[0].mxu0
    %v670 = vadd.f32 %v534, %v669
    %v671 = vpop.f32.mrb[0].mxu0
    %672 = vmatprep.mubr.bf16.mxu0 0
    %673 = vmatmul.mubr.bf16.gmra.mrb[0].mxu0 %v512
    %v674 = vpop.f32.mrb[0].mxu0
    %v675 = vadd.f32 %v534, %v674
    %v676 = vpop.f32.mrb[0].mxu0
    %v677 = vpop.f32.mrb[0].mxu0
    %v678 = vadd.f32 %v534, %v677
    %v679 = vpop.f32.mrb[0].mxu0
    %680 = vdwg.mxu0
    %v681 = vmax.f32 %v619, 0.0
    %v682 = vmax.f32 %v622, 0.0
    %v683 = vmax.f32 %v627, 0.0
    %v684 = vmax.f32 %v630, 0.0
    %v685 = vmax.f32 %v635, 0.0
    %v686 = vmax.f32 %v638, 0.0
    %v687 = vmax.f32 %v643, 0.0
    %v688 = vmax.f32 %v646, 0.0
    %v689 = vmax.f32 %v651, 0.0
    %v690 = vmax.f32 %v654, 0.0
    %v691 = vmax.f32 %v659, 0.0
    %v692 = vmax.f32 %v662, 0.0
    %v693 = vmax.f32 %v667, 0.0
    %v694 = vmax.f32 %v670, 0.0
    %v695 = vmax.f32 %v675, 0.0
    %v696 = vmax.f32 %v678, 0.0
    %v697 = vld [vmem:[%s6] sm:$0x1]
    %v699 = vlaneseq
    %v700 = vshrl.u32 %v699, 7
    %v701 = vsub.s32 0, %v700
    %v702 = vrot.slane %v697, %v701
    %v704 = vmul.f32 %v681, %v702
    %v705 = vmul.f32 %v682, %v702
    %v706 = vmul.f32 %v683, %v702
    %v707 = vmul.f32 %v684, %v702
    %v708 = vmul.f32 %v685, %v702
    %v709 = vmul.f32 %v686, %v702
    %v710 = vmul.f32 %v687, %v702
    %v711 = vmul.f32 %v688, %v702
    %v712 = vmul.f32 %v689, %v702
    %v713 = vmul.f32 %v690, %v702
    %v714 = vmul.f32 %v691, %v702
    %v715 = vmul.f32 %v692, %v702
    %v716 = vmul.f32 %v693, %v702
    %v717 = vmul.f32 %v694, %v702
    %v718 = vmul.f32 %v695, %v702
    %v719 = vmul.f32 %v696, %v702
    %v720 = vld [vmem:[%s7] sm:$0x1]
    %v722 = vlaneseq
    %v723 = vshrl.u32 %v722, 7
    %v724 = vsub.s32 0, %v723
    %v725 = vrot.slane %v720, %v724
    %v727 = vadd.f32 %v704, %v725
    %v728 = vadd.f32 %v705, %v725
    %v729 = vadd.f32 %v706, %v725
    %v730 = vadd.f32 %v707, %v725
    %v731 = vadd.f32 %v708, %v725
    %v732 = vadd.f32 %v709, %v725
    %v733 = vadd.f32 %v710, %v725
    %v734 = vadd.f32 %v711, %v725
    %v735 = vadd.f32 %v712, %v725
    %v736 = vadd.f32 %v713, %v725
    %v737 = vadd.f32 %v714, %v725
    %v738 = vadd.f32 %v715, %v725
    %v739 = vadd.f32 %v716, %v725
    %v740 = vadd.f32 %v717, %v725
    %v741 = vadd.f32 %v718, %v725
    %v742 = vadd.f32 %v719, %v725
    %743 = vst [vmem:[#allocation12] sm:$0xff] %v727
    %744 = vst [vmem:[#allocation12 + $0x8] sm:$0xff] %v728
    %745 = vst [vmem:[#allocation12 + $0x10] sm:$0xff] %v729
    %746 = vst [vmem:[#allocation12 + $0x18] sm:$0xff] %v730
    %747 = vst [vmem:[#allocation12 + $0x20] sm:$0xff] %v731
    %748 = vst [vmem:[#allocation12 + $0x28] sm:$0xff] %v732
    %749 = vst [vmem:[#allocation12 + $0x30] sm:$0xff] %v733
    %750 = vst [vmem:[#allocation12 + $0x38] sm:$0xff] %v734
    %751 = vst [vmem:[#allocation12 + $0x40] sm:$0xff] %v735
    %752 = vst [vmem:[#allocation12 + $0x48] sm:$0xff] %v736
    %753 = vst [vmem:[#allocation12 + $0x50] sm:$0xff] %v737
    %754 = vst [vmem:[#allocation12 + $0x58] sm:$0xff] %v738
    %755 = vst [vmem:[#allocation12 + $0x60] sm:$0xff] %v739
    %756 = vst [vmem:[#allocation12 + $0x68] sm:$0xff] %v740
    %757 = vst [vmem:[#allocation12 + $0x70] sm:$0xff] %v741
    %758 = vst [vmem:[#allocation12 + $0x78] sm:$0xff] %v742
    %v759 = vpack.c.bf16 %v728, %v727
    %v760 = vpack.c.bf16 %v730, %v729
    %v761 = vpack.c.bf16 %v732, %v731
    %v762 = vpack.c.bf16 %v734, %v733
    %v763 = vpack.c.bf16 %v736, %v735
    %v764 = vpack.c.bf16 %v738, %v737
    %v765 = vpack.c.bf16 %v740, %v739
    %v766 = vpack.c.bf16 %v742, %v741
    %v767 = vld [vmem:[#allocation6] sm:$0xf]
    %v768 = vld [vmem:[#allocation6 + $0x4] sm:$0xf]
    %v769 = vld [vmem:[#allocation6 + $0x8] sm:$0xf]
    %v770 = vld [vmem:[#allocation6 + $0xc] sm:$0xf]
    %v771 = vld [vmem:[#allocation6 + $0x10] sm:$0xf]
    %v772 = vld [vmem:[#allocation6 + $0x14] sm:$0xf]
    %v773 = vld [vmem:[#allocation6 + $0x18] sm:$0xf]
    %v774 = vld [vmem:[#allocation6 + $0x1c] sm:$0xf]
    %v775 = vld [vmem:[#allocation6 + $0x20] sm:$0xf]
    %v776 = vld [vmem:[#allocation6 + $0x24] sm:$0xf]
    %v777 = vld [vmem:[#allocation6 + $0x28] sm:$0xf]
    %v778 = vld [vmem:[#allocation6 + $0x2c] sm:$0xf]
    %v779 = vld [vmem:[#allocation6 + $0x30] sm:$0xf]
    %v780 = vld [vmem:[#allocation6 + $0x34] sm:$0xf]
    %v781 = vld [vmem:[#allocation6 + $0x38] sm:$0xf]
    %v782 = vld [vmem:[#allocation6 + $0x3c] sm:$0xf]
    %v799 = vunpack.c.l.b16 %v767
    %v800 = vunpack.c.l.b16 %v768
    %v801 = vunpack.c.l.b16 %v769
    %v802 = vunpack.c.l.b16 %v770
    %v803 = vunpack.c.l.b16 %v771
    %v804 = vunpack.c.l.b16 %v772
    %v805 = vunpack.c.l.b16 %v773
    %v806 = vunpack.c.l.b16 %v774
    %v807 = vunpack.c.l.b16 %v775
    %v808 = vunpack.c.l.b16 %v776
    %v809 = vunpack.c.l.b16 %v777
    %v810 = vunpack.c.l.b16 %v778
    %v811 = vunpack.c.l.b16 %v779
    %v812 = vunpack.c.l.b16 %v780
    %v813 = vunpack.c.l.b16 %v781
    %v814 = vunpack.c.l.b16 %v782
    %v815 = vpack.c.b16 %v800, %v799
    %v816 = vpack.c.b16 %v802, %v801
    %v817 = vpack.c.b16 %v804, %v803
    %v818 = vpack.c.b16 %v806, %v805
    %v819 = vpack.c.b16 %v808, %v807
    %v820 = vpack.c.b16 %v810, %v809
    %v821 = vpack.c.b16 %v812, %v811
    %v822 = vpack.c.b16 %v814, %v813
    %831 = vmatprep.subr.bf16.mxu0 0
    %832 = vmatpush1.bf16.msra.mxu0 %v759
    %833 = vmatprep.subr.bf16.mxu0 0
    %834 = vmatpush1.bf16.msra.mxu0 %v760
    %835 = vmatprep.subr.bf16.mxu0 0
    %836 = vmatpush1.bf16.msra.mxu0 %v761
    %837 = vmatprep.subr.bf16.mxu0 0
    %838 = vmatpush1.bf16.msra.mxu0 %v762
    %839 = vmatprep.subr.bf16.mxu0 0
    %840 = vmatpush1.bf16.msra.mxu0 %v763
    %841 = vmatprep.subr.bf16.mxu0 0
    %842 = vmatpush1.bf16.msra.mxu0 %v764
    %843 = vmatprep.subr.bf16.mxu0 0
    %844 = vmatpush1.bf16.msra.mxu0 %v765
    %845 = vmatprep.subr.bf16.mxu0 0
    %846 = vmatpush1.bf16.msra.mxu0 %v766
    %847 = vmatprep.subr.bf16.mxu0 0
    %848 = vmatpush1.bf16.msra.mxu0 0
    %849 = vmatprep.subr.bf16.mxu0 0
    %850 = vmatpush1.bf16.msra.mxu0 0
    %851 = vmatprep.subr.bf16.mxu0 0
    %852 = vmatpush1.bf16.msra.mxu0 0
    %853 = vmatprep.subr.bf16.mxu0 0
    %854 = vmatpush1.bf16.msra.mxu0 0
    %855 = vmatprep.subr.bf16.mxu0 0
    %856 = vmatpush1.bf16.msra.mxu0 0
    %857 = vmatprep.subr.bf16.mxu0 0
    %858 = vmatpush1.bf16.msra.mxu0 0
    %859 = vmatprep.subr.bf16.mxu0 0
    %860 = vmatpush1.bf16.msra.mxu0 0
    %861 = vmatprep.subr.bf16.mxu0 0
    %862 = vmatpush1.bf16.msra.mxu0 0
    %863 = vmatprep.mubr.bf16.mxu0 0
    %864 = vmatmul.mubr.bf16.gmra.mrb[0].mxu0 %v815
    %v865 = vpop.f32.mrb[0].mxu0
    %v866 = vadd.f32 0.0, %v865
    %v867 = vpop.f32.mrb[0].mxu0
    %v868 = vpop.f32.mrb[0].mxu0
    %v869 = vadd.f32 0.0, %v868
    %v870 = vpop.f32.mrb[0].mxu0
    %871 = vmatprep.mubr.bf16.mxu0 0
    %872 = vmatmul.mubr.bf16.gmra.mrb[0].mxu0 %v816
    %v873 = vpop.f32.mrb[0].mxu0
    %v874 = vadd.f32 0.0, %v873
    %v875 = vpop.f32.mrb[0].mxu0
    %v876 = vpop.f32.mrb[0].mxu0
    %v877 = vadd.f32 0.0, %v876
    %v878 = vpop.f32.mrb[0].mxu0
    %879 = vmatprep.mubr.bf16.mxu0 0
    %880 = vmatmul.mubr.bf16.gmra.mrb[0].mxu0 %v817
    %v881 = vpop.f32.mrb[0].mxu0
    %v882 = vadd.f32 0.0, %v881
    %v883 = vpop.f32.mrb[0].mxu0
    %v884 = vpop.f32.mrb[0].mxu0
    %v885 = vadd.f32 0.0, %v884
    %v886 = vpop.f32.mrb[0].mxu0
    %887 = vmatprep.mubr.bf16.mxu0 0
    %888 = vmatmul.mubr.bf16.gmra.mrb[0].mxu0 %v818
    %v889 = vpop.f32.mrb[0].mxu0
    %v890 = vadd.f32 0.0, %v889
    %v891 = vpop.f32.mrb[0].mxu0
    %v892 = vpop.f32.mrb[0].mxu0
    %v893 = vadd.f32 0.0, %v892
    %v894 = vpop.f32.mrb[0].mxu0
    %895 = vmatprep.mubr.bf16.mxu0 0
    %896 = vmatmul.mubr.bf16.gmra.mrb[0].mxu0 %v819
    %v897 = vpop.f32.mrb[0].mxu0
    %v898 = vadd.f32 0.0, %v897
    %v899 = vpop.f32.mrb[0].mxu0
    %v900 = vpop.f32.mrb[0].mxu0
    %v901 = vadd.f32 0.0, %v900
    %v902 = vpop.f32.mrb[0].mxu0
    %903 = vmatprep.mubr.bf16.mxu0 0
    %904 = vmatmul.mubr.bf16.gmra.mrb[0].mxu0 %v820
    %v905 = vpop.f32.mrb[0].mxu0
    %v906 = vadd.f32 0.0, %v905
    %v907 = vpop.f32.mrb[0].mxu0
    %v908 = vpop.f32.mrb[0].mxu0
    %v909 = vadd.f32 0.0, %v908
    %v910 = vpop.f32.mrb[0].mxu0
    %911 = vmatprep.mubr.bf16.mxu0 0
    %912 = vmatmul.mubr.bf16.gmra.mrb[0].mxu0 %v821
    %v913 = vpop.f32.mrb[0].mxu0
    %v914 = vadd.f32 0.0, %v913
    %v915 = vpop.f32.mrb[0].mxu0
    %v916 = vpop.f32.mrb[0].mxu0
    %v917 = vadd.f32 0.0, %v916
    %v918 = vpop.f32.mrb[0].mxu0
    %919 = vmatprep.mubr.bf16.mxu0 0
    %920 = vmatmul.mubr.bf16.gmra.mrb[0].mxu0 %v822
    %v921 = vpop.f32.mrb[0].mxu0
    %v922 = vadd.f32 0.0, %v921
    %v923 = vpop.f32.mrb[0].mxu0
    %v924 = vpop.f32.mrb[0].mxu0
    %v925 = vadd.f32 0.0, %v924
    %v926 = vpop.f32.mrb[0].mxu0
    %927 = vdwg.mxu0
    %v928 = vld [vmem:[%s8] sm:$0x1]
    %v930 = vlaneseq
    %v931 = vshrl.u32 %v930, 7
    %v932 = vsub.s32 0, %v931
    %v933 = vrot.slane %v928, %v932
    %v935 = vmul.f32 %v866, %v933
    %v936 = vmul.f32 %v869, %v933
    %v937 = vmul.f32 %v874, %v933
    %v938 = vmul.f32 %v877, %v933
    %v939 = vmul.f32 %v882, %v933
    %v940 = vmul.f32 %v885, %v933
    %v941 = vmul.f32 %v890, %v933
    %v942 = vmul.f32 %v893, %v933
    %v943 = vmul.f32 %v898, %v933
    %v944 = vmul.f32 %v901, %v933
    %v945 = vmul.f32 %v906, %v933
    %v946 = vmul.f32 %v909, %v933
    %v947 = vmul.f32 %v914, %v933
    %v948 = vmul.f32 %v917, %v933
    %v949 = vmul.f32 %v922, %v933
    %v950 = vmul.f32 %v925, %v933
    %v951 = vld [vmem:[%s9] sm:$0x1]
    %v953 = vlaneseq
    %v954 = vshrl.u32 %v953, 7
    %v955 = vsub.s32 0, %v954
    %v956 = vrot.slane %v951, %v955
    %v958 = vmul.f32 %v727, %v956
    %v959 = vmul.f32 %v728, %v956
    %v960 = vmul.f32 %v729, %v956
    %v961 = vmul.f32 %v730, %v956
    %v962 = vmul.f32 %v731, %v956
    %v963 = vmul.f32 %v732, %v956
    %v964 = vmul.f32 %v733, %v956
    %v965 = vmul.f32 %v734, %v956
    %v966 = vmul.f32 %v735, %v956
    %v967 = vmul.f32 %v736, %v956
    %v968 = vmul.f32 %v737, %v956
    %v969 = vmul.f32 %v738, %v956
    %v970 = vmul.f32 %v739, %v956
    %v971 = vmul.f32 %v740, %v956
    %v972 = vmul.f32 %v741, %v956
    %v973 = vmul.f32 %v742, %v956
    %v974 = vadd.f32 %v935, %v958
    %v975 = vadd.f32 %v936, %v959
    %v976 = vadd.f32 %v937, %v960
    %v977 = vadd.f32 %v938, %v961
    %v978 = vadd.f32 %v939, %v962
    %v979 = vadd.f32 %v940, %v963
    %v980 = vadd.f32 %v941, %v964
    %v981 = vadd.f32 %v942, %v965
    %v982 = vadd.f32 %v943, %v966
    %v983 = vadd.f32 %v944, %v967
    %v984 = vadd.f32 %v945, %v968
    %v985 = vadd.f32 %v946, %v969
    %v986 = vadd.f32 %v947, %v970
    %v987 = vadd.f32 %v948, %v971
    %v988 = vadd.f32 %v949, %v972
    %v989 = vadd.f32 %v950, %v973
    %990 = vadd.xlane.f32.xlu0 %v974
    %v991 = vpop.xlane.xlu0 %990
    %992 = vadd.xlane.f32.xlu0 %v975
    %v993 = vpop.xlane.xlu0 %992
    %994 = vadd.xlane.f32.xlu0 %v976
    %v995 = vpop.xlane.xlu0 %994
    %996 = vadd.xlane.f32.xlu0 %v977
    %v997 = vpop.xlane.xlu0 %996
    %998 = vadd.xlane.f32.xlu0 %v978
    %v999 = vpop.xlane.xlu0 %998
    %1000 = vadd.xlane.f32.xlu0 %v979
    %v1001 = vpop.xlane.xlu0 %1000
    %1002 = vadd.xlane.f32.xlu0 %v980
    %v1003 = vpop.xlane.xlu0 %1002
    %1004 = vadd.xlane.f32.xlu0 %v981
    %v1005 = vpop.xlane.xlu0 %1004
    %1006 = vadd.xlane.f32.xlu0 %v982
    %v1007 = vpop.xlane.xlu0 %1006
    %1008 = vadd.xlane.f32.xlu0 %v983
    %v1009 = vpop.xlane.xlu0 %1008
    %1010 = vadd.xlane.f32.xlu0 %v984
    %v1011 = vpop.xlane.xlu0 %1010
    %1012 = vadd.xlane.f32.xlu0 %v985
    %v1013 = vpop.xlane.xlu0 %1012
    %1014 = vadd.xlane.f32.xlu0 %v986
    %v1015 = vpop.xlane.xlu0 %1014
    %1016 = vadd.xlane.f32.xlu0 %v987
    %v1017 = vpop.xlane.xlu0 %1016
    %1018 = vadd.xlane.f32.xlu0 %v988
    %v1019 = vpop.xlane.xlu0 %1018
    %1020 = vadd.xlane.f32.xlu0 %v989
    %v1021 = vpop.xlane.xlu0 %1020
    %s1022 = sld [smem:[#allocation2]]
    %v1023 = vstv %s1022
    %v1024 = vadd.f32 %v991, %v1023
    %v1025 = vadd.f32 %v993, %v1023
    %v1026 = vadd.f32 %v995, %v1023
    %v1027 = vadd.f32 %v997, %v1023
    %v1028 = vadd.f32 %v999, %v1023
    %v1029 = vadd.f32 %v1001, %v1023
    %v1030 = vadd.f32 %v1003, %v1023
    %v1031 = vadd.f32 %v1005, %v1023
    %v1032 = vadd.f32 %v1007, %v1023
    %v1033 = vadd.f32 %v1009, %v1023
    %v1034 = vadd.f32 %v1011, %v1023
    %v1035 = vadd.f32 %v1013, %v1023
    %v1036 = vadd.f32 %v1015, %v1023
    %v1037 = vadd.f32 %v1017, %v1023
    %v1038 = vadd.f32 %v1019, %v1023
    %v1039 = vadd.f32 %v1021, %v1023
    %v1040 = vtanh.pop %v1024
    %v1041 = vtanh.pop %v1025
    %v1042 = vtanh.pop %v1026
    %v1043 = vtanh.pop %v1027
    %v1044 = vtanh.pop %v1028
    %v1045 = vtanh.pop %v1029
    %v1046 = vtanh.pop %v1030
    %v1047 = vtanh.pop %v1031
    %v1048 = vtanh.pop %v1032
    %v1049 = vtanh.pop %v1033
    %v1050 = vtanh.pop %v1034
    %v1051 = vtanh.pop %v1035
    %v1052 = vtanh.pop %v1036
    %v1053 = vtanh.pop %v1037
    %v1054 = vtanh.pop %v1038
    %v1055 = vtanh.pop %v1039
    %vm1056 = vcmask 7168
    %1057 = vst.msk [vmem:[%s12] sm:$0xff] %vm1056, %v1040
    %1058 = vst.msk [vmem:[%s12 + $0x8] sm:$0xff] %vm1056, %v1041
    %1059 = vst.msk [vmem:[%s12 + $0x10] sm:$0xff] %vm1056, %v1042
    %1060 = vst.msk [vmem:[%s12 + $0x18] sm:$0xff] %vm1056, %v1043
    %1061 = vst.msk [vmem:[%s12 + $0x20] sm:$0xff] %vm1056, %v1044
    %1062 = vst.msk [vmem:[%s12 + $0x28] sm:$0xff] %vm1056, %v1045
    %1063 = vst.msk [vmem:[%s12 + $0x30] sm:$0xff] %vm1056, %v1046
    %1064 = vst.msk [vmem:[%s12 + $0x38] sm:$0xff] %vm1056, %v1047
    %1065 = vst.msk [vmem:[%s12 + $0x40] sm:$0xff] %vm1056, %v1048
    %1066 = vst.msk [vmem:[%s12 + $0x48] sm:$0xff] %vm1056, %v1049
    %1067 = vst.msk [vmem:[%s12 + $0x50] sm:$0xff] %vm1056, %v1050
    %1068 = vst.msk [vmem:[%s12 + $0x58] sm:$0xff] %vm1056, %v1051
    %1069 = vst.msk [vmem:[%s12 + $0x60] sm:$0xff] %vm1056, %v1052
    %1070 = vst.msk [vmem:[%s12 + $0x68] sm:$0xff] %vm1056, %v1053
    %1071 = vst.msk [vmem:[%s12 + $0x70] sm:$0xff] %vm1056, %v1054
    %1072 = vst.msk [vmem:[%s12 + $0x78] sm:$0xff] %vm1056, %v1055
    // Predicated region
    $region66: #{tpu_custom_call.1} parent=1 // pred_check
      _
    $region67: #{tpu_custom_call.1} parent=1 // pred_check_branch
      %1074 = sbr.rel (0) target = $region69
    $region68: #{tpu_custom_call.1} parent=1 // pred_region
      %s1076 = ssub.s32 2048, 2048
      %1077 = vsyncadd [#allocation5], %s1076
      %s1078 = sshll.u32 [#allocation12], 4
      %s1079 = int_to_ptr.vmem [resolvable:$true] %s1078
      %1084 = dma.vmem_to_hbm [thread:$0]  %s1079, 2048, %s11, [#allocation5], 128, 128, 8
    $region69: #{tpu_custom_call.1} parent=1 // pred_fallthru
      _
    // Predicated region
    $region70: #{tpu_custom_call.1} parent=1 // pred_check
      _
    $region71: #{tpu_custom_call.1} parent=1 // pred_check_branch
      %1086 = sbr.rel (0) target = $region73
    $region72: #{tpu_custom_call.1} parent=1 // pred_region
      _
    $region73: #{tpu_custom_call.1} parent=1 // pred_fallthru
      _
    // Predicated region
    $region74: #{tpu_custom_call.1} parent=1 // pred_check
      _
    $region75: #{tpu_custom_call.1} parent=1 // pred_check_branch
      %1088 = sbr.rel (0) target = $region77
    $region76: #{tpu_custom_call.1} parent=1 // pred_region
      %1089 = dma.done [#allocation5], 2048
    $region77: #{tpu_custom_call.1} parent=1 // pred_fallthru
      _
    // Predicated region
    $region78: #{tpu_custom_call.1} parent=1 // pred_check
      _
    $region79: #{tpu_custom_call.1} parent=1 // pred_check_branch
      %1091 = sbr.rel (0) target = $region81
    $region80: #{tpu_custom_call.1} parent=1 // pred_region
      _
    $region81: #{tpu_custom_call.1} parent=1 // pred_fallthru
      _
    %1092 = vsyncpa [#allocation4], 1
    %1093 = vsyncpa [#allocation7], 1
    %1094 = vsyncpa [#allocation10], 1
    %1095 = vsyncpa [#allocation5], 1

</llo_original>
